<compile_context>
chip_gen: v7x
topology: tpu7x:2x2x1
jax: 0.10.0
libtpu: 0.0.40
codegen_flags: <defaults>
</compile_context>

<pallas_src>
import functools

import jax
import jax.numpy as jnp
from jax.experimental import pallas as pl
from jax.experimental.pallas import tpu as pltpu

BN_EPS = 1e-5


def _ae_mlp_kernel(x_ref,
                   w1_ref, b1_ref, g1_ref, be1_ref,     # embedder: Linear + BN
                   w2_ref, b2_ref,                       # embedder: Linear -> latent
                   w3_ref, b3_ref, g2_ref, be2_ref,      # builder: Linear + BN
                   w4_ref, b4_ref,                       # builder: Linear -> in_dim
                   out_ref, sse_ref,
                   *, mm_dtype):
    n = x_ref.shape[0]                     # static: real batch rows only
    inv_n = 1.0 / float(n)

    x = x_ref[...].astype(jnp.float32)     # (b, in_dim), f32

    def linear(a_f32, w_ref, b_ref):
        # MXU operands in mm_dtype (bf16 default); f32 accumulation; f32 bias.
        return (jnp.dot(a_f32.astype(mm_dtype), w_ref[...],
                        preferred_element_type=jnp.float32)
                + b_ref[...])

    def bn_relu(h, g_ref, be_ref):
        # Training-mode BatchNorm1d (biased variance), two-pass statistics for
        # numerical robustness, fused into a per-feature scale, then ReLU.
        mean = jnp.sum(h, axis=0, keepdims=True) * inv_n
        cen = h - mean
        var = jnp.sum(cen * cen, axis=0, keepdims=True) * inv_n
        scale = g_ref[...] * jax.lax.rsqrt(var + BN_EPS)
        return jnp.maximum(cen * scale + be_ref[...], 0.0)

    # ---- embedder ----
    h1 = bn_relu(linear(x, w1_ref, b1_ref), g1_ref, be1_ref)
    z = linear(h1, w2_ref, b2_ref)
    # ---- builder ----
    h2 = bn_relu(linear(z, w3_ref, b3_ref), g2_ref, be2_ref)
    recon = linear(h2, w4_ref, b4_ref)

    out_ref[...] = recon.astype(out_ref.dtype)

    # Per-feature sum of squared errors (lane-dense (1, in_dim) output);
    # the scalar mean is finished in the wrapper.
    diff = recon - x
    sse_ref[...] = jnp.sum(diff * diff, axis=0, keepdims=True)


def prepare_params(params, matmul_dtype=jnp.bfloat16):
    """Cast the matmul weights to the MXU dtype ONCE (cache the result);
    biases / BN parameters stay f32."""
    (w1, b1, g1, be1, w2, b2, w3, b3, g2, be2, w4, b4) = params
    md = matmul_dtype
    f32 = lambda a: jnp.asarray(a, jnp.float32)
    return (jnp.asarray(w1, md), f32(b1), f32(g1), f32(be1),
            jnp.asarray(w2, md), f32(b2),
            jnp.asarray(w3, md), f32(b3), f32(g2), f32(be2),
            jnp.asarray(w4, md), f32(b4))


def _vmem_budget_bytes(b, in_dim, h, latent, mm_bytes):
    weights = (in_dim * h + h * latent + latent * h + h * in_dim) * mm_bytes
    acts = b * (2 * in_dim + 2 * h + latent) * 4          # x, recon, h1, h2, z (f32)
    small = (5 * in_dim + 8 * h + 2 * latent) * 4          # biases/BN/sse rows
    est = weights + acts + small
    return int(min(100 << 20, max(4 << 20, 2 * est)))      # 2x headroom, clamp


@jax.jit
def autoencoder_mlp_forward(x, prepared_params):
    """Replicates Autoencoder_MLP.forward: returns (loss, x_recon, None).

    `prepared_params` must come from prepare_params() (weights already in the
    desired MXU dtype), so no per-call weight casts happen here.
    """
    b, c, t = x.shape
    in_dim = c * t
    x2 = x.reshape(b, in_dim)                      # no-copy reshape

    w1 = prepared_params[0]
    mm_dtype = w1.dtype
    h = w1.shape[1]
    latent = prepared_params[4].shape[1]

    kernel = functools.partial(_ae_mlp_kernel, mm_dtype=mm_dtype)
    ins = (x2,) + tuple(prepared_params)

    recon2, sse = pl.pallas_call(
        kernel,
        out_shape=(
            jax.ShapeDtypeStruct((b, in_dim), x.dtype),
            jax.ShapeDtypeStruct((1, in_dim), jnp.float32),
        ),
        in_specs=[pl.BlockSpec(memory_space=pltpu.MemorySpace.VMEM)] * len(ins),
        out_specs=(
            pl.BlockSpec(memory_space=pltpu.MemorySpace.VMEM),
            pl.BlockSpec(memory_space=pltpu.MemorySpace.VMEM),
        ),
        compiler_params=pltpu.CompilerParams(
            vmem_limit_bytes=_vmem_budget_bytes(b, in_dim, h, latent,
                                                jnp.dtype(mm_dtype).itemsize),
        ),
    )(*ins)

    loss = jnp.sum(sse) / jnp.float32(b * in_dim)
    recon = recon2.reshape(b, c, t)
    return loss, recon, None


def init_params(key, in_dim, h, latent_dim, dtype=jnp.float32):
    """Deterministic synthetic init (PyTorch-Linear-style uniform bounds)."""
    ks = jax.random.split(key, 8)

    def lin(kw, kb, fin, fout):
        bound = 1.0 / (fin ** 0.5)
        w = jax.random.uniform(kw, (fin, fout), dtype, -bound, bound)
        bb = jax.random.uniform(kb, (1, fout), dtype, -bound, bound)
        return w, bb

    w1, b1 = lin(ks[0], ks[1], in_dim, h)
    g1, be1 = jnp.ones((1, h), dtype), jnp.zeros((1, h), dtype)
    w2, b2 = lin(ks[2], ks[3], h, latent_dim)
    w3, b3 = lin(ks[4], ks[5], latent_dim, h)
    g2, be2 = jnp.ones((1, h), dtype), jnp.zeros((1, h), dtype)
    w4, b4 = lin(ks[6], ks[7], h, in_dim)
    return (w1, b1, g1, be1, w2, b2, w3, b3, g2, be2, w4, b4)


def _reference_forward(x, params, matmul_dtype=jnp.float32):
    """Pure-JAX reference mirroring the PyTorch module (training-mode BN)."""
    (w1, b1, g1, be1, w2, b2, w3, b3, g2, be2, w4, b4) = params
    b, c, t = x.shape
    xf = x.reshape(b, c * t).astype(jnp.float32)
    md = matmul_dtype

    def lin(a, w, bb):
        return (jnp.dot(a.astype(md), w.astype(md),
                        preferred_element_type=jnp.float32)
                + bb.astype(jnp.float32))

    def bn(h, g, be):
        mu = jnp.mean(h, axis=0, keepdims=True)
        var = jnp.mean((h - mu) ** 2, axis=0, keepdims=True)
        return (h - mu) / jnp.sqrt(var + BN_EPS) * g + be

    h1 = jnp.maximum(bn(lin(xf, w1, b1), g1, be1), 0.0)
    z = lin(h1, w2, b2)
    h2 = jnp.maximum(bn(lin(z, w3, b3), g2, be2), 0.0)
    recon = lin(h2, w4, b4)
    loss = jnp.mean((recon - xf) ** 2)
    return loss, recon.reshape(b, c, t)


if __name__ == "__main__":
    # Small shapes consistent with forward(): x is (b, c, t), in_dim = c * t.
    C, T = 4, 32
    IN_DIM = C * T            # 128
    H = 128
    LATENT = 64

    key = jax.random.PRNGKey(0)
    kx, kp = jax.random.split(key)
    params = init_params(kp, IN_DIM, H, LATENT)

    # 1) Exact-semantics f32 path (weights prepared once, f32).
    p_f32 = prepare_params(params, matmul_dtype=jnp.float32)
    B1 = 8
    x1 = jax.random.normal(kx, (B1, C, T), dtype=jnp.float32)
    loss32, recon32, _ = autoencoder_mlp_forward(x1, p_f32)
    jax.block_until_ready((loss32, recon32))
    ref_loss32, ref_recon32 = _reference_forward(x1, params, jnp.float32)
    assert jnp.allclose(loss32, ref_loss32, rtol=1e-4, atol=1e-5), (loss32, ref_loss32)
    assert jnp.allclose(recon32, ref_recon32, rtol=1e-4, atol=1e-4)

    # 2) Production bf16-MXU path (weight + activation quantization into the
    #    matmuls only; BN/ReLU/loss stay f32), non-8-aligned batch.
    p_bf16 = prepare_params(params, matmul_dtype=jnp.bfloat16)
    B2 = 6
    x2 = jax.random.normal(jax.random.fold_in(kx, 1), (B2, C, T), dtype=jnp.float32)
    loss16, recon16, _ = autoencoder_mlp_forward(x2, p_bf16)
    jax.block_until_ready((loss16, recon16))
    ref_loss16, ref_recon16 = _reference_forward(x2, params, jnp.bfloat16)
    assert jnp.allclose(loss16, ref_loss16, rtol=2e-2, atol=2e-2), (loss16, ref_loss16)
    assert jnp.allclose(recon16, ref_recon16, rtol=2e-2, atol=2e-2)

    print("KERNEL_OK")
</pallas_src>

<mosaic_0001>
module attributes {stable_mosaic.version = 11 : i64} {
  func.func @_ae_mlp_kernel(%arg0: memref<8x128xf32, #tpu.memory_space<vmem>>, %arg1: memref<128x128xf32, #tpu.memory_space<vmem>>, %arg2: memref<1x128xf32, #tpu.memory_space<vmem>>, %arg3: memref<1x128xf32, #tpu.memory_space<vmem>>, %arg4: memref<1x128xf32, #tpu.memory_space<vmem>>, %arg5: memref<128x64xf32, #tpu.memory_space<vmem>>, %arg6: memref<1x64xf32, #tpu.memory_space<vmem>>, %arg7: memref<64x128xf32, #tpu.memory_space<vmem>>, %arg8: memref<1x128xf32, #tpu.memory_space<vmem>>, %arg9: memref<1x128xf32, #tpu.memory_space<vmem>>, %arg10: memref<1x128xf32, #tpu.memory_space<vmem>>, %arg11: memref<128x128xf32, #tpu.memory_space<vmem>>, %arg12: memref<1x128xf32, #tpu.memory_space<vmem>>, %arg13: memref<8x128xf32, #tpu.memory_space<vmem>>, %arg14: memref<1x128xf32, #tpu.memory_space<vmem>>) attributes {dimension_semantics = [], scalar_prefetch = 0 : i64, scratch_operands = 0 : i64, tpu.core_type = #tpu.core_type<tc>} {
    %c0 = arith.constant 0 : index
    %c0_0 = arith.constant 0 : index
    %0 = vector.load %arg0[%c0, %c0_0] : memref<8x128xf32, #tpu.memory_space<vmem>>, vector<8x128xf32>
    %c0_1 = arith.constant 0 : index
    %c0_2 = arith.constant 0 : index
    %1 = vector.load %arg1[%c0_1, %c0_2] : memref<128x128xf32, #tpu.memory_space<vmem>>, vector<128x128xf32>
    %cst = arith.constant dense<0.000000e+00> : vector<8x128xf32>
    %2 = tpu.matmul %0, %1, %cst {dimension_numbers = #tpu.dot_dimension_numbers<[1], [0], [0], [1], [0, 0, 1, 1], [], []>} : vector<8x128xf32>, vector<128x128xf32>, vector<8x128xf32> -> vector<8x128xf32>
    %c0_3 = arith.constant 0 : index
    %c0_4 = arith.constant 0 : index
    %3 = vector.load %arg2[%c0_3, %c0_4] : memref<1x128xf32, #tpu.memory_space<vmem>>, vector<1x128xf32>
    %4 = vector.broadcast %3 : vector<1x128xf32> to vector<8x128xf32>
    %5 = arith.addf %2, %4 : vector<8x128xf32>
    %cst_5 = arith.constant dense<0.000000e+00> : vector<128xf32>
    %6 = vector.multi_reduction <add>, %5, %cst_5 [0] : vector<8x128xf32> to vector<128xf32>
    %7 = vector.shape_cast %6 : vector<128xf32> to vector<1x128xf32>
    %cst_6 = arith.constant 1.250000e-01 : f32
    %8 = vector.broadcast %cst_6 : f32 to vector<1x128xf32>
    %9 = arith.mulf %7, %8 : vector<1x128xf32>
    %10 = vector.broadcast %9 : vector<1x128xf32> to vector<8x128xf32>
    %11 = arith.subf %5, %10 : vector<8x128xf32>
    %12 = arith.mulf %11, %11 : vector<8x128xf32>
    %cst_7 = arith.constant dense<0.000000e+00> : vector<128xf32>
    %13 = vector.multi_reduction <add>, %12, %cst_7 [0] : vector<8x128xf32> to vector<128xf32>
    %14 = vector.shape_cast %13 : vector<128xf32> to vector<1x128xf32>
    %cst_8 = arith.constant 1.250000e-01 : f32
    %15 = vector.broadcast %cst_8 : f32 to vector<1x128xf32>
    %16 = arith.mulf %14, %15 : vector<1x128xf32>
    %c0_9 = arith.constant 0 : index
    %c0_10 = arith.constant 0 : index
    %17 = vector.load %arg3[%c0_9, %c0_10] : memref<1x128xf32, #tpu.memory_space<vmem>>, vector<1x128xf32>
    %cst_11 = arith.constant 9.99999974E-6 : f32
    %18 = vector.broadcast %cst_11 : f32 to vector<1x128xf32>
    %19 = arith.addf %16, %18 : vector<1x128xf32>
    %20 = math.rsqrt %19 : vector<1x128xf32>
    %21 = arith.mulf %17, %20 : vector<1x128xf32>
    %22 = vector.broadcast %21 : vector<1x128xf32> to vector<8x128xf32>
    %23 = arith.mulf %11, %22 : vector<8x128xf32>
    %c0_12 = arith.constant 0 : index
    %c0_13 = arith.constant 0 : index
    %24 = vector.load %arg4[%c0_12, %c0_13] : memref<1x128xf32, #tpu.memory_space<vmem>>, vector<1x128xf32>
    %25 = vector.broadcast %24 : vector<1x128xf32> to vector<8x128xf32>
    %26 = arith.addf %23, %25 : vector<8x128xf32>
    %cst_14 = arith.constant 0.000000e+00 : f32
    %27 = vector.broadcast %cst_14 : f32 to vector<8x128xf32>
    %28 = arith.maximumf %26, %27 : vector<8x128xf32>
    %c0_15 = arith.constant 0 : index
    %c0_16 = arith.constant 0 : index
    %29 = vector.load %arg5[%c0_15, %c0_16] : memref<128x64xf32, #tpu.memory_space<vmem>>, vector<128x64xf32>
    %cst_17 = arith.constant dense<0.000000e+00> : vector<8x64xf32>
    %30 = tpu.matmul %28, %29, %cst_17 {dimension_numbers = #tpu.dot_dimension_numbers<[1], [0], [0], [1], [0, 0, 1, 1], [], []>} : vector<8x128xf32>, vector<128x64xf32>, vector<8x64xf32> -> vector<8x64xf32>
    %c0_18 = arith.constant 0 : index
    %c0_19 = arith.constant 0 : index
    %31 = vector.load %arg6[%c0_18, %c0_19] : memref<1x64xf32, #tpu.memory_space<vmem>>, vector<1x64xf32>
    %32 = vector.broadcast %31 : vector<1x64xf32> to vector<8x64xf32>
    %33 = arith.addf %30, %32 : vector<8x64xf32>
    %c0_20 = arith.constant 0 : index
    %c0_21 = arith.constant 0 : index
    %34 = vector.load %arg7[%c0_20, %c0_21] : memref<64x128xf32, #tpu.memory_space<vmem>>, vector<64x128xf32>
    %cst_22 = arith.constant dense<0.000000e+00> : vector<8x128xf32>
    %35 = tpu.matmul %33, %34, %cst_22 {dimension_numbers = #tpu.dot_dimension_numbers<[1], [0], [0], [1], [0, 0, 1, 1], [], []>} : vector<8x64xf32>, vector<64x128xf32>, vector<8x128xf32> -> vector<8x128xf32>
    %c0_23 = arith.constant 0 : index
    %c0_24 = arith.constant 0 : index
    %36 = vector.load %arg8[%c0_23, %c0_24] : memref<1x128xf32, #tpu.memory_space<vmem>>, vector<1x128xf32>
    %37 = vector.broadcast %36 : vector<1x128xf32> to vector<8x128xf32>
    %38 = arith.addf %35, %37 : vector<8x128xf32>
    %cst_25 = arith.constant dense<0.000000e+00> : vector<128xf32>
    %39 = vector.multi_reduction <add>, %38, %cst_25 [0] : vector<8x128xf32> to vector<128xf32>
    %40 = vector.shape_cast %39 : vector<128xf32> to vector<1x128xf32>
    %cst_26 = arith.constant 1.250000e-01 : f32
    %41 = vector.broadcast %cst_26 : f32 to vector<1x128xf32>
    %42 = arith.mulf %40, %41 : vector<1x128xf32>
    %43 = vector.broadcast %42 : vector<1x128xf32> to vector<8x128xf32>
    %44 = arith.subf %38, %43 : vector<8x128xf32>
    %45 = arith.mulf %44, %44 : vector<8x128xf32>
    %cst_27 = arith.constant dense<0.000000e+00> : vector<128xf32>
    %46 = vector.multi_reduction <add>, %45, %cst_27 [0] : vector<8x128xf32> to vector<128xf32>
    %47 = vector.shape_cast %46 : vector<128xf32> to vector<1x128xf32>
    %cst_28 = arith.constant 1.250000e-01 : f32
    %48 = vector.broadcast %cst_28 : f32 to vector<1x128xf32>
    %49 = arith.mulf %47, %48 : vector<1x128xf32>
    %c0_29 = arith.constant 0 : index
    %c0_30 = arith.constant 0 : index
    %50 = vector.load %arg9[%c0_29, %c0_30] : memref<1x128xf32, #tpu.memory_space<vmem>>, vector<1x128xf32>
    %cst_31 = arith.constant 9.99999974E-6 : f32
    %51 = vector.broadcast %cst_31 : f32 to vector<1x128xf32>
    %52 = arith.addf %49, %51 : vector<1x128xf32>
    %53 = math.rsqrt %52 : vector<1x128xf32>
    %54 = arith.mulf %50, %53 : vector<1x128xf32>
    %55 = vector.broadcast %54 : vector<1x128xf32> to vector<8x128xf32>
    %56 = arith.mulf %44, %55 : vector<8x128xf32>
    %c0_32 = arith.constant 0 : index
    %c0_33 = arith.constant 0 : index
    %57 = vector.load %arg10[%c0_32, %c0_33] : memref<1x128xf32, #tpu.memory_space<vmem>>, vector<1x128xf32>
    %58 = vector.broadcast %57 : vector<1x128xf32> to vector<8x128xf32>
    %59 = arith.addf %56, %58 : vector<8x128xf32>
    %cst_34 = arith.constant 0.000000e+00 : f32
    %60 = vector.broadcast %cst_34 : f32 to vector<8x128xf32>
    %61 = arith.maximumf %59, %60 : vector<8x128xf32>
    %c0_35 = arith.constant 0 : index
    %c0_36 = arith.constant 0 : index
    %62 = vector.load %arg11[%c0_35, %c0_36] : memref<128x128xf32, #tpu.memory_space<vmem>>, vector<128x128xf32>
    %cst_37 = arith.constant dense<0.000000e+00> : vector<8x128xf32>
    %63 = tpu.matmul %61, %62, %cst_37 {dimension_numbers = #tpu.dot_dimension_numbers<[1], [0], [0], [1], [0, 0, 1, 1], [], []>} : vector<8x128xf32>, vector<128x128xf32>, vector<8x128xf32> -> vector<8x128xf32>
    %c0_38 = arith.constant 0 : index
    %c0_39 = arith.constant 0 : index
    %64 = vector.load %arg12[%c0_38, %c0_39] : memref<1x128xf32, #tpu.memory_space<vmem>>, vector<1x128xf32>
    %65 = vector.broadcast %64 : vector<1x128xf32> to vector<8x128xf32>
    %66 = arith.addf %63, %65 : vector<8x128xf32>
    %c0_40 = arith.constant 0 : index
    %c0_41 = arith.constant 0 : index
    %67 = vector.load %arg13[%c0_40, %c0_41] : memref<8x128xf32, #tpu.memory_space<vmem>>, vector<8x128xf32>
    tpu.vector_store %arg13[%c0_40, %c0_41], %66 {strides = array<i32>} : memref<8x128xf32, #tpu.memory_space<vmem>>, vector<8x128xf32>,
    %68 = arith.subf %66, %0 : vector<8x128xf32>
    %69 = arith.mulf %68, %68 : vector<8x128xf32>
    %cst_42 = arith.constant dense<0.000000e+00> : vector<128xf32>
    %70 = vector.multi_reduction <add>, %69, %cst_42 [0] : vector<8x128xf32> to vector<128xf32>
    %71 = vector.shape_cast %70 : vector<128xf32> to vector<1x128xf32>
    %c0_43 = arith.constant 0 : index
    %c0_44 = arith.constant 0 : index
    %72 = vector.load %arg14[%c0_43, %c0_44] : memref<1x128xf32, #tpu.memory_space<vmem>>, vector<1x128xf32>
    tpu.vector_store %arg14[%c0_43, %c0_44], %71 {strides = array<i32>} : memref<1x128xf32, #tpu.memory_space<vmem>>, vector<1x128xf32>,
    return
  }
}

</mosaic_0001>

<llo_original>
// kernel: autoencoder_mlp_forward.1
$region0: #{autoencoder_mlp_forward.1}
  #allocation0 [shape = 'u32[]', space=smem, size = 0x4, offset = 0x4, fixed_abs, tag = 'smem constant byte address 0x4 - core index']
  #allocation1 [shape = 'u32[144,128]{1,0:T(1,128)}', space=vmem, size = 0x12000, scoped, tag = 'internal scratch']
  %s0 = inlined_call_operand.vmem [shape: f32[8,128], index: 0, kind: input, shape index: {}]
  %s1 = inlined_call_operand.vmem [shape: f32[128,128], index: 1, kind: input, shape index: {}]
  %s2 = inlined_call_operand.vmem [shape: f32[1,128], index: 2, kind: input, shape index: {}]
  %s3 = inlined_call_operand.vmem [shape: f32[1,128], index: 3, kind: input, shape index: {}]
  %s4 = inlined_call_operand.hbm [shape: f32[1,128], index: 4, kind: input, shape index: {}]
  %s5 = inlined_call_operand.vmem [shape: f32[128,64], index: 5, kind: input, shape index: {}]
  %s6 = inlined_call_operand.hbm [shape: f32[1,64], index: 6, kind: input, shape index: {}]
  %s7 = inlined_call_operand.hbm [shape: f32[64,128], index: 7, kind: input, shape index: {}]
  %s8 = inlined_call_operand.vmem [shape: f32[1,128], index: 8, kind: input, shape index: {}]
  %s9 = inlined_call_operand.vmem [shape: f32[1,128], index: 9, kind: input, shape index: {}]
  %s10 = inlined_call_operand.vmem [shape: f32[1,128], index: 10, kind: input, shape index: {}]
  %s11 = inlined_call_operand.vmem [shape: f32[128,128], index: 11, kind: input, shape index: {}]
  %s12 = inlined_call_operand.vmem [shape: f32[1,128], index: 12, kind: input, shape index: {}]
  %s13 = inlined_call_operand.vmem [shape: f32[8,128], index: 13, kind: output, shape index: {0}]
  %s14 = inlined_call_operand.vmem [shape: f32[1,128], index: 14, kind: output, shape index: {1}]
  %15 = xla_tuple %s13, %s14
  %s16 = sld [smem:[#allocation0]]
  $region82: #{autoencoder_mlp_forward.1} parent=0
    _
  %s18 = ssub.s32 1, %s16
  %s19 = scalar_select 0, %s18, %s16
  $region1: #{autoencoder_mlp_forward.1} parent=0
    #allocation2 [shape = 'u8[512]{0}', space=vmem, size = 0x400, scoped, tag = 'input window, operand 4, single buffered']
    #allocation3 [shape = 's32[1]{0}', space=sflag, size = 0x4, scoped, tag = 'scoped memory for autoencoder_mlp_forward.1']
    #allocation4 [shape = 'u8[512]{0}', space=vmem, size = 0x400, scoped, tag = 'input window, operand 6, single buffered']
    #allocation5 [shape = 's32[1]{0}', space=sflag, size = 0x4, scoped, tag = 'scoped memory for autoencoder_mlp_forward.1']
    #allocation6 [shape = 'u8[32768]{0}', space=vmem, size = 0x8000, scoped, tag = 'input window, operand 7, single buffered']
    %20 = vsyncpa [#allocation3], 0
    %21 = vsyncpa [#allocation5], 0
    // Predicated region
    $region2: #{autoencoder_mlp_forward.1} parent=1 // pred_check
      _
    $region3: #{autoencoder_mlp_forward.1} parent=1 // pred_check_branch
      %23 = sbr.rel (0) target = $region5
    $region4: #{autoencoder_mlp_forward.1} parent=1 // pred_region
      _
    $region5: #{autoencoder_mlp_forward.1} parent=1 // pred_fallthru
      _
    // Predicated region
    $region6: #{autoencoder_mlp_forward.1} parent=1 // pred_check
      _
    $region7: #{autoencoder_mlp_forward.1} parent=1 // pred_check_branch
      %25 = sbr.rel (0) target = $region9
    $region8: #{autoencoder_mlp_forward.1} parent=1 // pred_region
      _
    $region9: #{autoencoder_mlp_forward.1} parent=1 // pred_fallthru
      _
    // Predicated region
    $region10: #{autoencoder_mlp_forward.1} parent=1 // pred_check
      _
    $region11: #{autoencoder_mlp_forward.1} parent=1 // pred_check_branch
      %27 = sbr.rel (0) target = $region13
    $region12: #{autoencoder_mlp_forward.1} parent=1 // pred_region
      _
    $region13: #{autoencoder_mlp_forward.1} parent=1 // pred_fallthru
      _
    // Predicated region
    $region14: #{autoencoder_mlp_forward.1} parent=1 // pred_check
      _
    $region15: #{autoencoder_mlp_forward.1} parent=1 // pred_check_branch
      %29 = sbr.rel (0) target = $region17
    $region16: #{autoencoder_mlp_forward.1} parent=1 // pred_region
      _
    $region17: #{autoencoder_mlp_forward.1} parent=1 // pred_fallthru
      _
    // Predicated region
    $region18: #{autoencoder_mlp_forward.1} parent=1 // pred_check
      _
    $region19: #{autoencoder_mlp_forward.1} parent=1 // pred_check_branch
      %31 = sbr.rel (0) target = $region21
    $region20: #{autoencoder_mlp_forward.1} parent=1 // pred_region
      %s33 = ssub.s32 16, 16
      %34 = vsyncadd [#allocation3], %s33
      %s36 = sshll.u32 [#allocation2], 4
      %s37 = int_to_ptr.vmem [resolvable:$true] %s36
      %39 = dma.hbm_to_vmem [thread:$0]  %s4, 16, %s37, [#allocation3]
    $region21: #{autoencoder_mlp_forward.1} parent=1 // pred_fallthru
      _
    // Predicated region
    $region22: #{autoencoder_mlp_forward.1} parent=1 // pred_check
      _
    $region23: #{autoencoder_mlp_forward.1} parent=1 // pred_check_branch
      %41 = sbr.rel (0) target = $region25
    $region24: #{autoencoder_mlp_forward.1} parent=1 // pred_region
      _
    $region25: #{autoencoder_mlp_forward.1} parent=1 // pred_fallthru
      _
    // Predicated region
    $region26: #{autoencoder_mlp_forward.1} parent=1 // pred_check
      _
    $region27: #{autoencoder_mlp_forward.1} parent=1 // pred_check_branch
      %43 = sbr.rel (0) target = $region29
    $region28: #{autoencoder_mlp_forward.1} parent=1 // pred_region
      %s45 = ssub.s32 16, 16
      %46 = vsyncadd [#allocation5], %s45
      %s48 = sshll.u32 [#allocation4], 4
      %s49 = int_to_ptr.vmem [resolvable:$true] %s48
      %51 = dma.hbm_to_vmem [thread:$0]  %s6, 16, %s49, [#allocation5]
    $region29: #{autoencoder_mlp_forward.1} parent=1 // pred_fallthru
      _
    // Predicated region
    $region30: #{autoencoder_mlp_forward.1} parent=1 // pred_check
      _
    $region31: #{autoencoder_mlp_forward.1} parent=1 // pred_check_branch
      %53 = sbr.rel (0) target = $region33
    $region32: #{autoencoder_mlp_forward.1} parent=1 // pred_region
      %s55 = ssub.s32 1024, 1024
      %56 = vsyncadd [#allocation5], %s55
      %s57 = sshll.u32 [#allocation6], 4
      %s58 = int_to_ptr.vmem [resolvable:$true] %s57
      %63 = dma.hbm_to_vmem [thread:$0]  %s7, 1024, %s58, [#allocation5], 128, 128, 8
    $region33: #{autoencoder_mlp_forward.1} parent=1 // pred_fallthru
      _
    // Predicated region
    $region34: #{autoencoder_mlp_forward.1} parent=1 // pred_check
      _
    $region35: #{autoencoder_mlp_forward.1} parent=1 // pred_check_branch
      %65 = sbr.rel (0) target = $region37
    $region36: #{autoencoder_mlp_forward.1} parent=1 // pred_region
      _
    $region37: #{autoencoder_mlp_forward.1} parent=1 // pred_fallthru
      _
    // Predicated region
    $region38: #{autoencoder_mlp_forward.1} parent=1 // pred_check
      _
    $region39: #{autoencoder_mlp_forward.1} parent=1 // pred_check_branch
      %67 = sbr.rel (0) target = $region41
    $region40: #{autoencoder_mlp_forward.1} parent=1 // pred_region
      _
    $region41: #{autoencoder_mlp_forward.1} parent=1 // pred_fallthru
      _
    // Predicated region
    $region42: #{autoencoder_mlp_forward.1} parent=1 // pred_check
      _
    $region43: #{autoencoder_mlp_forward.1} parent=1 // pred_check_branch
      %69 = sbr.rel (0) target = $region45
    $region44: #{autoencoder_mlp_forward.1} parent=1 // pred_region
      _
    $region45: #{autoencoder_mlp_forward.1} parent=1 // pred_fallthru
      _
    // Predicated region
    $region46: #{autoencoder_mlp_forward.1} parent=1 // pred_check
      _
    $region47: #{autoencoder_mlp_forward.1} parent=1 // pred_check_branch
      %71 = sbr.rel (0) target = $region49
    $region48: #{autoencoder_mlp_forward.1} parent=1 // pred_region
      _
    $region49: #{autoencoder_mlp_forward.1} parent=1 // pred_fallthru
      _
    // Predicated region
    $region50: #{autoencoder_mlp_forward.1} parent=1 // pred_check
      _
    $region51: #{autoencoder_mlp_forward.1} parent=1 // pred_check_branch
      %73 = sbr.rel (0) target = $region53
    $region52: #{autoencoder_mlp_forward.1} parent=1 // pred_region
      _
    $region53: #{autoencoder_mlp_forward.1} parent=1 // pred_fallthru
      _
    // Predicated region
    $region54: #{autoencoder_mlp_forward.1} parent=1 // pred_check
      _
    $region55: #{autoencoder_mlp_forward.1} parent=1 // pred_check_branch
      %75 = sbr.rel (0) target = $region57
    $region56: #{autoencoder_mlp_forward.1} parent=1 // pred_region
      %76 = dma.done [#allocation3], 16
    $region57: #{autoencoder_mlp_forward.1} parent=1 // pred_fallthru
      _
    // Predicated region
    $region58: #{autoencoder_mlp_forward.1} parent=1 // pred_check
      _
    $region59: #{autoencoder_mlp_forward.1} parent=1 // pred_check_branch
      %78 = sbr.rel (0) target = $region61
    $region60: #{autoencoder_mlp_forward.1} parent=1 // pred_region
      %79 = dma.done [#allocation5], 16
    $region61: #{autoencoder_mlp_forward.1} parent=1 // pred_fallthru
      _
    // Predicated region
    $region62: #{autoencoder_mlp_forward.1} parent=1 // pred_check
      _
    $region63: #{autoencoder_mlp_forward.1} parent=1 // pred_check_branch
      %81 = sbr.rel (0) target = $region65
    $region64: #{autoencoder_mlp_forward.1} parent=1 // pred_region
      %82 = dma.done [#allocation5], 1024
    $region65: #{autoencoder_mlp_forward.1} parent=1 // pred_fallthru
      _
    %v83 = vld [vmem:[%s0] sm:$0xff]
    %v84 = vld [vmem:[%s1] sm:$0xff]
    %v85 = vld [vmem:[%s1 + $0x8] sm:$0xff]
    %v86 = vld [vmem:[%s1 + $0x10] sm:$0xff]
    %v87 = vld [vmem:[%s1 + $0x18] sm:$0xff]
    %v88 = vld [vmem:[%s1 + $0x20] sm:$0xff]
    %v89 = vld [vmem:[%s1 + $0x28] sm:$0xff]
    %v90 = vld [vmem:[%s1 + $0x30] sm:$0xff]
    %v91 = vld [vmem:[%s1 + $0x38] sm:$0xff]
    %v92 = vld [vmem:[%s1 + $0x40] sm:$0xff]
    %v93 = vld [vmem:[%s1 + $0x48] sm:$0xff]
    %v94 = vld [vmem:[%s1 + $0x50] sm:$0xff]
    %v95 = vld [vmem:[%s1 + $0x58] sm:$0xff]
    %v96 = vld [vmem:[%s1 + $0x60] sm:$0xff]
    %v97 = vld [vmem:[%s1 + $0x68] sm:$0xff]
    %v98 = vld [vmem:[%s1 + $0x70] sm:$0xff]
    %v99 = vld [vmem:[%s1 + $0x78] sm:$0xff]
    %v100 = vld [vmem:[%s2] sm:$0x1]
    %v102 = vlaneseq
    %v103 = vshrl.u32 %v102, 7
    %v104 = vsub.s32 0, %v103
    %v105 = vrot.slane %v100, %v104
    %107 = vmatprep.subr.mxu0 0.0
    %108 = vmatpush1.msra.mxu0 %v84
    %109 = vmatprep.subr.mxu0 0.0
    %110 = vmatpush1.msra.mxu0 %v85
    %111 = vmatprep.subr.mxu0 0.0
    %112 = vmatpush1.msra.mxu0 %v86
    %113 = vmatprep.subr.mxu0 0.0
    %114 = vmatpush1.msra.mxu0 %v87
    %115 = vmatprep.subr.mxu0 0.0
    %116 = vmatpush1.msra.mxu0 %v88
    %117 = vmatprep.subr.mxu0 0.0
    %118 = vmatpush1.msra.mxu0 %v89
    %119 = vmatprep.subr.mxu0 0.0
    %120 = vmatpush1.msra.mxu0 %v90
    %121 = vmatprep.subr.mxu0 0.0
    %122 = vmatpush1.msra.mxu0 %v91
    %123 = vmatprep.subr.mxu0 0.0
    %124 = vmatpush1.msra.mxu0 %v92
    %125 = vmatprep.subr.mxu0 0.0
    %126 = vmatpush1.msra.mxu0 %v93
    %127 = vmatprep.subr.mxu0 0.0
    %128 = vmatpush1.msra.mxu0 %v94
    %129 = vmatprep.subr.mxu0 0.0
    %130 = vmatpush1.msra.mxu0 %v95
    %131 = vmatprep.subr.mxu0 0.0
    %132 = vmatpush1.msra.mxu0 %v96
    %133 = vmatprep.subr.mxu0 0.0
    %134 = vmatpush1.msra.mxu0 %v97
    %135 = vmatprep.subr.mxu0 0.0
    %136 = vmatpush1.msra.mxu0 %v98
    %137 = vmatprep.subr.mxu0 0.0
    %138 = vmatpush1.msra.mxu0 %v99
    %139 = vmatprep.subr.mxu0 0.0
    %140 = vmatpush1.msra.mxu0 0.0
    %141 = vmatprep.subr.mxu0 0.0
    %142 = vmatpush1.msra.mxu0 0.0
    %143 = vmatprep.subr.mxu0 0.0
    %144 = vmatpush1.msra.mxu0 0.0
    %145 = vmatprep.subr.mxu0 0.0
    %146 = vmatpush1.msra.mxu0 0.0
    %147 = vmatprep.subr.mxu0 0.0
    %148 = vmatpush1.msra.mxu0 0.0
    %149 = vmatprep.subr.mxu0 0.0
    %150 = vmatpush1.msra.mxu0 0.0
    %151 = vmatprep.subr.mxu0 0.0
    %152 = vmatpush1.msra.mxu0 0.0
    %153 = vmatprep.subr.mxu0 0.0
    %154 = vmatpush1.msra.mxu0 0.0
    %155 = vmatprep.subr.mxu0 0.0
    %156 = vmatpush1.msra.mxu0 0.0
    %157 = vmatprep.subr.mxu0 0.0
    %158 = vmatpush1.msra.mxu0 0.0
    %159 = vmatprep.subr.mxu0 0.0
    %160 = vmatpush1.msra.mxu0 0.0
    %161 = vmatprep.subr.mxu0 0.0
    %162 = vmatpush1.msra.mxu0 0.0
    %163 = vmatprep.subr.mxu0 0.0
    %164 = vmatpush1.msra.mxu0 0.0
    %165 = vmatprep.subr.mxu0 0.0
    %166 = vmatpush1.msra.mxu0 0.0
    %167 = vmatprep.subr.mxu0 0.0
    %168 = vmatpush1.msra.mxu0 0.0
    %169 = vmatprep.subr.mxu0 0.0
    %170 = vmatpush1.msra.mxu0 0.0
    %171 = vmatprep.mubr.f32.mxu0 0.0
    %172 = vmatmul.mubr.f32.gmra.mrb[0].mxu0 %v83
    %v173 = vpop.f32.mrb[0].mxu0
    %v174 = vadd.f32 %v105, %v173
    %v175 = vpop.f32.mrb[0].mxu0
    %176 = vdwg.mxu0
    %v177 = vrot.slane %v174, 4
    %v178 = vadd.f32 %v174, %v177
    %v179 = vrot.slane %v178, 2
    %v180 = vadd.f32 %v178, %v179
    %v181 = vrot.slane %v180, 1
    %v182 = vadd.f32 %v180, %v181
    %v183 = vmul.f32 %v182, 0.125
    %v184 = vsub.f32 %v174, %v183
    %v185 = vmul.f32 %v184, %v184
    %v186 = vrot.slane %v185, 4
    %v187 = vadd.f32 %v185, %v186
    %v188 = vrot.slane %v187, 2
    %v189 = vadd.f32 %v187, %v188
    %v190 = vrot.slane %v189, 1
    %v191 = vadd.f32 %v189, %v190
    %v192 = vmul.f32 %v191, 0.125
    %v193 = vld [vmem:[%s3] sm:$0x1]
    %v194 = vadd.f32 %v192, 1e-05
    %v195 = vrsqrt.pop %v194
    %v196 = vmul.f32 %v193, %v195
    %v198 = vlaneseq
    %v199 = vshrl.u32 %v198, 7
    %v200 = vsub.s32 0, %v199
    %v201 = vrot.slane %v196, %v200
    %v203 = vmul.f32 %v184, %v201
    %v204 = vld [vmem:[#allocation2] sm:$0x1]
    %v206 = vlaneseq
    %v207 = vshrl.u32 %v206, 7
    %v208 = vsub.s32 0, %v207
    %v209 = vrot.slane %v204, %v208
    %v211 = vadd.f32 %v203, %v209
    %v212 = vmax.f32 %v211, 0.0
    %v213 = vld [vmem:[%s5] sm:$0xff]
    %v214 = vld [vmem:[%s5 + $0x8] sm:$0xff]
    %v215 = vld [vmem:[%s5 + $0x10] sm:$0xff]
    %v216 = vld [vmem:[%s5 + $0x18] sm:$0xff]
    %v217 = vld [vmem:[%s5 + $0x20] sm:$0xff]
    %v218 = vld [vmem:[%s5 + $0x28] sm:$0xff]
    %v219 = vld [vmem:[%s5 + $0x30] sm:$0xff]
    %v220 = vld [vmem:[%s5 + $0x38] sm:$0xff]
    %v221 = vld [vmem:[%s5 + $0x40] sm:$0xff]
    %v222 = vld [vmem:[%s5 + $0x48] sm:$0xff]
    %v223 = vld [vmem:[%s5 + $0x50] sm:$0xff]
    %v224 = vld [vmem:[%s5 + $0x58] sm:$0xff]
    %v225 = vld [vmem:[%s5 + $0x60] sm:$0xff]
    %v226 = vld [vmem:[%s5 + $0x68] sm:$0xff]
    %v227 = vld [vmem:[%s5 + $0x70] sm:$0xff]
    %v228 = vld [vmem:[%s5 + $0x78] sm:$0xff]
    %v229 = vld [vmem:[#allocation4] sm:$0x1]
    %v231 = vlaneseq
    %v232 = vshrl.u32 %v231, 7
    %v233 = vsub.s32 0, %v232
    %v234 = vrot.slane %v229, %v233
    %236 = vmatprep.subr.mxu0 0.0
    %237 = vmatpush1.msra.mxu0 %v213
    %238 = vmatprep.subr.mxu0 0.0
    %239 = vmatpush1.msra.mxu0 %v214
    %240 = vmatprep.subr.mxu0 0.0
    %241 = vmatpush1.msra.mxu0 %v215
    %242 = vmatprep.subr.mxu0 0.0
    %243 = vmatpush1.msra.mxu0 %v216
    %244 = vmatprep.subr.mxu0 0.0
    %245 = vmatpush1.msra.mxu0 %v217
    %246 = vmatprep.subr.mxu0 0.0
    %247 = vmatpush1.msra.mxu0 %v218
    %248 = vmatprep.subr.mxu0 0.0
    %249 = vmatpush1.msra.mxu0 %v219
    %250 = vmatprep.subr.mxu0 0.0
    %251 = vmatpush1.msra.mxu0 %v220
    %252 = vmatprep.subr.mxu0 0.0
    %253 = vmatpush1.msra.mxu0 %v221
    %254 = vmatprep.subr.mxu0 0.0
    %255 = vmatpush1.msra.mxu0 %v222
    %256 = vmatprep.subr.mxu0 0.0
    %257 = vmatpush1.msra.mxu0 %v223
    %258 = vmatprep.subr.mxu0 0.0
    %259 = vmatpush1.msra.mxu0 %v224
    %260 = vmatprep.subr.mxu0 0.0
    %261 = vmatpush1.msra.mxu0 %v225
    %262 = vmatprep.subr.mxu0 0.0
    %263 = vmatpush1.msra.mxu0 %v226
    %264 = vmatprep.subr.mxu0 0.0
    %265 = vmatpush1.msra.mxu0 %v227
    %266 = vmatprep.subr.mxu0 0.0
    %267 = vmatpush1.msra.mxu0 %v228
    %268 = vmatprep.subr.mxu0 0.0
    %269 = vmatpush1.msra.mxu0 0.0
    %270 = vmatprep.subr.mxu0 0.0
    %271 = vmatpush1.msra.mxu0 0.0
    %272 = vmatprep.subr.mxu0 0.0
    %273 = vmatpush1.msra.mxu0 0.0
    %274 = vmatprep.subr.mxu0 0.0
    %275 = vmatpush1.msra.mxu0 0.0
    %276 = vmatprep.subr.mxu0 0.0
    %277 = vmatpush1.msra.mxu0 0.0
    %278 = vmatprep.subr.mxu0 0.0
    %279 = vmatpush1.msra.mxu0 0.0
    %280 = vmatprep.subr.mxu0 0.0
    %281 = vmatpush1.msra.mxu0 0.0
    %282 = vmatprep.subr.mxu0 0.0
    %283 = vmatpush1.msra.mxu0 0.0
    %284 = vmatprep.subr.mxu0 0.0
    %285 = vmatpush1.msra.mxu0 0.0
    %286 = vmatprep.subr.mxu0 0.0
    %287 = vmatpush1.msra.mxu0 0.0
    %288 = vmatprep.subr.mxu0 0.0
    %289 = vmatpush1.msra.mxu0 0.0
    %290 = vmatprep.subr.mxu0 0.0
    %291 = vmatpush1.msra.mxu0 0.0
    %292 = vmatprep.subr.mxu0 0.0
    %293 = vmatpush1.msra.mxu0 0.0
    %294 = vmatprep.subr.mxu0 0.0
    %295 = vmatpush1.msra.mxu0 0.0
    %296 = vmatprep.subr.mxu0 0.0
    %297 = vmatpush1.msra.mxu0 0.0
    %298 = vmatprep.subr.mxu0 0.0
    %299 = vmatpush1.msra.mxu0 0.0
    %300 = vmatprep.mubr.f32.mxu0 0.0
    %301 = vmatmul.mubr.f32.gmra.mrb[0].mxu0 %v212
    %v302 = vpop.f32.mrb[0].mxu0
    %v303 = vadd.f32 %v234, %v302
    %v304 = vpop.f32.mrb[0].mxu0
    %305 = vdwg.mxu0
    %v306 = vld [vmem:[#allocation6] sm:$0xff]
    %v307 = vld [vmem:[#allocation6 + $0x8] sm:$0xff]
    %v308 = vld [vmem:[#allocation6 + $0x10] sm:$0xff]
    %v309 = vld [vmem:[#allocation6 + $0x18] sm:$0xff]
    %v310 = vld [vmem:[#allocation6 + $0x20] sm:$0xff]
    %v311 = vld [vmem:[#allocation6 + $0x28] sm:$0xff]
    %v312 = vld [vmem:[#allocation6 + $0x30] sm:$0xff]
    %v313 = vld [vmem:[#allocation6 + $0x38] sm:$0xff]
    %v314 = vld [vmem:[%s8] sm:$0x1]
    %v316 = vlaneseq
    %v317 = vshrl.u32 %v316, 7
    %v318 = vsub.s32 0, %v317
    %v319 = vrot.slane %v314, %v318
    %vm321 = vcmask 523264
    %v323 = vsel %vm321, %v303, 0
    %325 = vmatprep.subr.mxu0 0.0
    %326 = vmatpush1.msra.mxu0 %v306
    %327 = vmatprep.subr.mxu0 0.0
    %328 = vmatpush1.msra.mxu0 %v307
    %329 = vmatprep.subr.mxu0 0.0
    %330 = vmatpush1.msra.mxu0 %v308
    %331 = vmatprep.subr.mxu0 0.0
    %332 = vmatpush1.msra.mxu0 %v309
    %333 = vmatprep.subr.mxu0 0.0
    %334 = vmatpush1.msra.mxu0 %v310
    %335 = vmatprep.subr.mxu0 0.0
    %336 = vmatpush1.msra.mxu0 %v311
    %337 = vmatprep.subr.mxu0 0.0
    %338 = vmatpush1.msra.mxu0 %v312
    %339 = vmatprep.subr.mxu0 0.0
    %340 = vmatpush1.msra.mxu0 %v313
    %341 = vmatprep.subr.mxu0 0.0
    %342 = vmatpush1.msra.mxu0 0.0
    %343 = vmatprep.subr.mxu0 0.0
    %344 = vmatpush1.msra.mxu0 0.0
    %345 = vmatprep.subr.mxu0 0.0
    %346 = vmatpush1.msra.mxu0 0.0
    %347 = vmatprep.subr.mxu0 0.0
    %348 = vmatpush1.msra.mxu0 0.0
    %349 = vmatprep.subr.mxu0 0.0
    %350 = vmatpush1.msra.mxu0 0.0
    %351 = vmatprep.subr.mxu0 0.0
    %352 = vmatpush1.msra.mxu0 0.0
    %353 = vmatprep.subr.mxu0 0.0
    %354 = vmatpush1.msra.mxu0 0.0
    %355 = vmatprep.subr.mxu0 0.0
    %356 = vmatpush1.msra.mxu0 0.0
    %357 = vmatprep.subr.mxu0 0.0
    %358 = vmatpush1.msra.mxu0 0.0
    %359 = vmatprep.subr.mxu0 0.0
    %360 = vmatpush1.msra.mxu0 0.0
    %361 = vmatprep.subr.mxu0 0.0
    %362 = vmatpush1.msra.mxu0 0.0
    %363 = vmatprep.subr.mxu0 0.0
    %364 = vmatpush1.msra.mxu0 0.0
    %365 = vmatprep.subr.mxu0 0.0
    %366 = vmatpush1.msra.mxu0 0.0
    %367 = vmatprep.subr.mxu0 0.0
    %368 = vmatpush1.msra.mxu0 0.0
    %369 = vmatprep.subr.mxu0 0.0
    %370 = vmatpush1.msra.mxu0 0.0
    %371 = vmatprep.subr.mxu0 0.0
    %372 = vmatpush1.msra.mxu0 0.0
    %373 = vmatprep.subr.mxu0 0.0
    %374 = vmatpush1.msra.mxu0 0.0
    %375 = vmatprep.subr.mxu0 0.0
    %376 = vmatpush1.msra.mxu0 0.0
    %377 = vmatprep.subr.mxu0 0.0
    %378 = vmatpush1.msra.mxu0 0.0
    %379 = vmatprep.subr.mxu0 0.0
    %380 = vmatpush1.msra.mxu0 0.0
    %381 = vmatprep.subr.mxu0 0.0
    %382 = vmatpush1.msra.mxu0 0.0
    %383 = vmatprep.subr.mxu0 0.0
    %384 = vmatpush1.msra.mxu0 0.0
    %385 = vmatprep.subr.mxu0 0.0
    %386 = vmatpush1.msra.mxu0 0.0
    %387 = vmatprep.subr.mxu0 0.0
    %388 = vmatpush1.msra.mxu0 0.0
    %389 = vmatprep.mubr.f32.mxu0 0.0
    %390 = vmatmul.mubr.f32.gmra.mrb[0].mxu0 %v323
    %v391 = vpop.f32.mrb[0].mxu0
    %v392 = vadd.f32 %v319, %v391
    %v393 = vpop.f32.mrb[0].mxu0
    %394 = vdwg.mxu0
    %v395 = vrot.slane %v392, 4
    %v396 = vadd.f32 %v392, %v395
    %v397 = vrot.slane %v396, 2
    %v398 = vadd.f32 %v396, %v397
    %v399 = vrot.slane %v398, 1
    %v400 = vadd.f32 %v398, %v399
    %v401 = vmul.f32 %v400, 0.125
    %v402 = vsub.f32 %v392, %v401
    %v403 = vmul.f32 %v402, %v402
    %v404 = vrot.slane %v403, 4
    %v405 = vadd.f32 %v403, %v404
    %v406 = vrot.slane %v405, 2
    %v407 = vadd.f32 %v405, %v406
    %v408 = vrot.slane %v407, 1
    %v409 = vadd.f32 %v407, %v408
    %v410 = vmul.f32 %v409, 0.125
    %v411 = vld [vmem:[%s9] sm:$0x1]
    %v412 = vadd.f32 %v410, 1e-05
    %v413 = vrsqrt.pop %v412
    %v414 = vmul.f32 %v411, %v413
    %v416 = vlaneseq
    %v417 = vshrl.u32 %v416, 7
    %v418 = vsub.s32 0, %v417
    %v419 = vrot.slane %v414, %v418
    %v421 = vmul.f32 %v402, %v419
    %v422 = vld [vmem:[%s10] sm:$0x1]
    %v424 = vlaneseq
    %v425 = vshrl.u32 %v424, 7
    %v426 = vsub.s32 0, %v425
    %v427 = vrot.slane %v422, %v426
    %v429 = vadd.f32 %v421, %v427
    %v430 = vmax.f32 %v429, 0.0
    %v431 = vld [vmem:[%s11] sm:$0xff]
    %v432 = vld [vmem:[%s11 + $0x8] sm:$0xff]
    %v433 = vld [vmem:[%s11 + $0x10] sm:$0xff]
    %v434 = vld [vmem:[%s11 + $0x18] sm:$0xff]
    %v435 = vld [vmem:[%s11 + $0x20] sm:$0xff]
    %v436 = vld [vmem:[%s11 + $0x28] sm:$0xff]
    %v437 = vld [vmem:[%s11 + $0x30] sm:$0xff]
    %v438 = vld [vmem:[%s11 + $0x38] sm:$0xff]
    %v439 = vld [vmem:[%s11 + $0x40] sm:$0xff]
    %v440 = vld [vmem:[%s11 + $0x48] sm:$0xff]
    %v441 = vld [vmem:[%s11 + $0x50] sm:$0xff]
    %v442 = vld [vmem:[%s11 + $0x58] sm:$0xff]
    %v443 = vld [vmem:[%s11 + $0x60] sm:$0xff]
    %v444 = vld [vmem:[%s11 + $0x68] sm:$0xff]
    %v445 = vld [vmem:[%s11 + $0x70] sm:$0xff]
    %v446 = vld [vmem:[%s11 + $0x78] sm:$0xff]
    %v447 = vld [vmem:[%s12] sm:$0x1]
    %v449 = vlaneseq
    %v450 = vshrl.u32 %v449, 7
    %v451 = vsub.s32 0, %v450
    %v452 = vrot.slane %v447, %v451
    %454 = vmatprep.subr.mxu0 0.0
    %455 = vmatpush1.msra.mxu0 %v431
    %456 = vmatprep.subr.mxu0 0.0
    %457 = vmatpush1.msra.mxu0 %v432
    %458 = vmatprep.subr.mxu0 0.0
    %459 = vmatpush1.msra.mxu0 %v433
    %460 = vmatprep.subr.mxu0 0.0
    %461 = vmatpush1.msra.mxu0 %v434
    %462 = vmatprep.subr.mxu0 0.0
    %463 = vmatpush1.msra.mxu0 %v435
    %464 = vmatprep.subr.mxu0 0.0
    %465 = vmatpush1.msra.mxu0 %v436
    %466 = vmatprep.subr.mxu0 0.0
    %467 = vmatpush1.msra.mxu0 %v437
    %468 = vmatprep.subr.mxu0 0.0
    %469 = vmatpush1.msra.mxu0 %v438
    %470 = vmatprep.subr.mxu0 0.0
    %471 = vmatpush1.msra.mxu0 %v439
    %472 = vmatprep.subr.mxu0 0.0
    %473 = vmatpush1.msra.mxu0 %v440
    %474 = vmatprep.subr.mxu0 0.0
    %475 = vmatpush1.msra.mxu0 %v441
    %476 = vmatprep.subr.mxu0 0.0
    %477 = vmatpush1.msra.mxu0 %v442
    %478 = vmatprep.subr.mxu0 0.0
    %479 = vmatpush1.msra.mxu0 %v443
    %480 = vmatprep.subr.mxu0 0.0
    %481 = vmatpush1.msra.mxu0 %v444
    %482 = vmatprep.subr.mxu0 0.0
    %483 = vmatpush1.msra.mxu0 %v445
    %484 = vmatprep.subr.mxu0 0.0
    %485 = vmatpush1.msra.mxu0 %v446
    %486 = vmatprep.subr.mxu0 0.0
    %487 = vmatpush1.msra.mxu0 0.0
    %488 = vmatprep.subr.mxu0 0.0
    %489 = vmatpush1.msra.mxu0 0.0
    %490 = vmatprep.subr.mxu0 0.0
    %491 = vmatpush1.msra.mxu0 0.0
    %492 = vmatprep.subr.mxu0 0.0
    %493 = vmatpush1.msra.mxu0 0.0
    %494 = vmatprep.subr.mxu0 0.0
    %495 = vmatpush1.msra.mxu0 0.0
    %496 = vmatprep.subr.mxu0 0.0
    %497 = vmatpush1.msra.mxu0 0.0
    %498 = vmatprep.subr.mxu0 0.0
    %499 = vmatpush1.msra.mxu0 0.0
    %500 = vmatprep.subr.mxu0 0.0
    %501 = vmatpush1.msra.mxu0 0.0
    %502 = vmatprep.subr.mxu0 0.0
    %503 = vmatpush1.msra.mxu0 0.0
    %504 = vmatprep.subr.mxu0 0.0
    %505 = vmatpush1.msra.mxu0 0.0
    %506 = vmatprep.subr.mxu0 0.0
    %507 = vmatpush1.msra.mxu0 0.0
    %508 = vmatprep.subr.mxu0 0.0
    %509 = vmatpush1.msra.mxu0 0.0
    %510 = vmatprep.subr.mxu0 0.0
    %511 = vmatpush1.msra.mxu0 0.0
    %512 = vmatprep.subr.mxu0 0.0
    %513 = vmatpush1.msra.mxu0 0.0
    %514 = vmatprep.subr.mxu0 0.0
    %515 = vmatpush1.msra.mxu0 0.0
    %516 = vmatprep.subr.mxu0 0.0
    %517 = vmatpush1.msra.mxu0 0.0
    %518 = vmatprep.mubr.f32.mxu0 0.0
    %519 = vmatmul.mubr.f32.gmra.mrb[0].mxu0 %v430
    %v520 = vpop.f32.mrb[0].mxu0
    %v521 = vadd.f32 %v452, %v520
    %v522 = vpop.f32.mrb[0].mxu0
    %523 = vdwg.mxu0
    %524 = vst [vmem:[%s13] sm:$0xff] %v521
    %v525 = vsub.f32 %v521, %v83
    %v526 = vmul.f32 %v525, %v525
    %v527 = vrot.slane %v526, 4
    %v528 = vadd.f32 %v526, %v527
    %v529 = vrot.slane %v528, 2
    %v530 = vadd.f32 %v528, %v529
    %v531 = vrot.slane %v530, 1
    %v532 = vadd.f32 %v530, %v531
    %533 = vst [vmem:[%s14] sm:$0x1] %v532
    // Predicated region
    $region66: #{autoencoder_mlp_forward.1} parent=1 // pred_check
      _
    $region67: #{autoencoder_mlp_forward.1} parent=1 // pred_check_branch
      %535 = sbr.rel (0) target = $region69
    $region68: #{autoencoder_mlp_forward.1} parent=1 // pred_region
      _
    $region69: #{autoencoder_mlp_forward.1} parent=1 // pred_fallthru
      _
    // Predicated region
    $region70: #{autoencoder_mlp_forward.1} parent=1 // pred_check
      _
    $region71: #{autoencoder_mlp_forward.1} parent=1 // pred_check_branch
      %537 = sbr.rel (0) target = $region73
    $region72: #{autoencoder_mlp_forward.1} parent=1 // pred_region
      _
    $region73: #{autoencoder_mlp_forward.1} parent=1 // pred_fallthru
      _
    // Predicated region
    $region74: #{autoencoder_mlp_forward.1} parent=1 // pred_check
      _
    $region75: #{autoencoder_mlp_forward.1} parent=1 // pred_check_branch
      %539 = sbr.rel (0) target = $region77
    $region76: #{autoencoder_mlp_forward.1} parent=1 // pred_region
      _
    $region77: #{autoencoder_mlp_forward.1} parent=1 // pred_fallthru
      _
    // Predicated region
    $region78: #{autoencoder_mlp_forward.1} parent=1 // pred_check
      _
    $region79: #{autoencoder_mlp_forward.1} parent=1 // pred_check_branch
      %541 = sbr.rel (0) target = $region81
    $region80: #{autoencoder_mlp_forward.1} parent=1 // pred_region
      _
    $region81: #{autoencoder_mlp_forward.1} parent=1 // pred_fallthru
      _
    %542 = vsyncpa [#allocation3], 1
    %543 = vsyncpa [#allocation5], 1

</llo_original>
